<compile_context>
chip_gen: v5e
topology: v5e:2x2
jax: 0.10.0
libtpu: 0.0.40
codegen_flags: <defaults>
</compile_context>

<pallas_src>
import jax
import jax.numpy as jnp
from jax.experimental import pallas as pl
from jax.experimental.pallas import tpu as pltpu


def _transition_kernel(x_ref, scale_ref, shift_ref, w_ref, b_ref, o_ref):
    # x_ref:       (1, th, 2, Wp, 2*Cin)   lane axis packs (w-window, channel)
    # scale/shift: (1, 2*Cin)              folded BN affine * 0.25, tiled over w-window
    # w_ref:       (Cin, Cout_pad)         1x1 conv weight (transposed, lane-padded)
    # b_ref:       (1, Cout_pad)
    # o_ref:       (1, th, Wp, Cout_pad)
    cin = w_ref.shape[0]

    x = x_ref[0]                                            # (th, 2, Wp, 2*Cin)
    # BatchNorm (folded scale/shift, incl. the 0.25 pooling factor) + ReLU (VPU).
    y = jnp.maximum(x * scale_ref[0] + shift_ref[0], 0.0)

    # 2x2 average pool BEFORE the conv:
    #   h-window: add the two leading-dim slices (plain vreg-group add)
    #   w-window: add the two lane halves of the packed (w2, c) lane axis
    yh = y[:, 0] + y[:, 1]                                  # (th, Wp, 2*Cin)
    p = yh[..., :cin] + yh[..., cin:]                       # (th, Wp, Cin)  (already /4)

    th, wp, _ = p.shape
    z = jnp.dot(p.reshape(th * wp, cin).astype(w_ref.dtype), w_ref[...],
                preferred_element_type=jnp.float32)         # (th*Wp, Cout_pad)  MXU
    z = z + b_ref[0]
    o_ref[0] = z.reshape(th, wp, -1).astype(o_ref.dtype)


def transition_layer(x_nchw, gamma, beta, conv_w, conv_b, eps=1e-5,
                     mxu_dtype=jnp.float32):
    N, Cin, H, W = x_nchw.shape
    # TODO(synk): ceil_mode=True only differs from floor mode for odd H/W; only
    # even spatial sizes are implemented here.
    assert H % 2 == 0 and W % 2 == 0, "odd spatial dims (ceil_mode path) not implemented"
    Cout = conv_w.shape[0]
    Hp, Wp = H // 2, W // 2

    x_nchw = x_nchw.astype(jnp.float32)

    # Training-mode BatchNorm2d: per-channel batch statistics (biased variance),
    # computed in a single fused pass (sum + sum of squares), folded into a
    # per-channel scale/shift.  The 0.25 pooling normalization is folded in too
    # (valid because relu(0.25*v) == 0.25*relu(v)).
    cnt = N * H * W
    s1 = jnp.sum(x_nchw, axis=(0, 2, 3))
    s2 = jnp.sum(jnp.square(x_nchw), axis=(0, 2, 3))
    mean = s1 / cnt
    var = jnp.maximum(s2 / cnt - jnp.square(mean), 0.0)
    scale = gamma.astype(jnp.float32) / jnp.sqrt(var + eps)
    shift = beta.astype(jnp.float32) - mean * scale
    scale = scale * 0.25
    shift = shift * 0.25

    # Single NCHW -> NHWC transpose, then a free reshape exposing the 2x2
    # pooling window: (N, Hp, 2, Wp, 2*Cin).  Lane axis index = w2*Cin + c.
    x = jnp.transpose(x_nchw, (0, 2, 3, 1)).reshape(N, Hp, 2, Wp, 2 * Cin)

    # Fold the BN affine across both w-window positions of the lane axis.
    scale2 = jnp.tile(scale, 2).reshape(1, 2 * Cin)
    shift2 = jnp.tile(shift, 2).reshape(1, 2 * Cin)

    # 1x1 conv weight/bias, padded so the output last dim is a multiple of 128
    # (lane-dense, unmasked stores).  Padding lives only in the tiny weight/bias.
    Cout_pad = int(pl.cdiv(Cout, 128)) * 128
    pad_n = Cout_pad - Cout
    w = jnp.pad(conv_w.reshape(Cout, Cin).T, ((0, 0), (0, pad_n))).astype(mxu_dtype)
    b = jnp.pad(conv_b.astype(jnp.float32).reshape(1, Cout), ((0, 0), (0, pad_n)))

    # Spatial tiling over Hp rows; sized to keep double-buffered blocks well
    # inside the scoped-VMEM limit on every generation (v5e 16 MiB default,
    # v7x 64 MiB physical).
    row_in = 2 * W * Cin * 4          # bytes per Hp-row of the input block
    row_out = Wp * Cout_pad * 4       # bytes per Hp-row of the output block
    budget = 6 << 20
    th = max(1, min(Hp, budget // max(1, row_in + row_out)))
    while Hp % th:                    # make the tile divide Hp exactly
        th -= 1
    n_tiles = Hp // th

    const_bytes = (2 * (2 * Cin) + Cin * Cout_pad + Cout_pad) * 4
    vmem_limit = int(min(
        48 << 20,
        max(16 << 20, 2 * th * (row_in + row_out) + 2 * const_bytes + (2 << 20))))

    out = pl.pallas_call(
        _transition_kernel,
        out_shape=jax.ShapeDtypeStruct((N, Hp, Wp, Cout_pad), jnp.float32),
        grid_spec=pltpu.PrefetchScalarGridSpec(
            num_scalar_prefetch=0,
            grid=(N, n_tiles),
            in_specs=[
                pl.BlockSpec((1, th, 2, Wp, 2 * Cin), lambda n, t: (n, t, 0, 0, 0)),
                pl.BlockSpec((1, 2 * Cin), lambda n, t: (0, 0)),
                pl.BlockSpec((1, 2 * Cin), lambda n, t: (0, 0)),
                pl.BlockSpec((Cin, Cout_pad), lambda n, t: (0, 0)),
                pl.BlockSpec((1, Cout_pad), lambda n, t: (0, 0)),
            ],
            out_specs=pl.BlockSpec((1, th, Wp, Cout_pad), lambda n, t: (n, t, 0, 0)),
        ),
        compiler_params=pltpu.CompilerParams(
            dimension_semantics=("parallel", "parallel"),
            vmem_limit_bytes=vmem_limit,
        ),
    )(x, scale2, shift2, w, b)

    if pad_n:
        out = out[..., :Cout]
    return jnp.transpose(out, (0, 3, 1, 2))                 # back to NCHW


def _reference(x_nchw, gamma, beta, conv_w, conv_b, eps=1e-5):
    mean = jnp.mean(x_nchw, axis=(0, 2, 3), keepdims=True)
    var = jnp.var(x_nchw, axis=(0, 2, 3), keepdims=True)
    y = (x_nchw - mean) / jnp.sqrt(var + eps)
    y = y * gamma.reshape(1, -1, 1, 1) + beta.reshape(1, -1, 1, 1)
    y = jnp.maximum(y, 0.0)
    w2 = conv_w.reshape(conv_w.shape[0], conv_w.shape[1])
    z = jnp.einsum('nchw,oc->nohw', y, w2) + conv_b.reshape(1, -1, 1, 1)
    N, Co, H, W = z.shape
    return z.reshape(N, Co, H // 2, 2, W // 2, 2).mean(axis=(3, 5))


if __name__ == "__main__":
    key = jax.random.PRNGKey(0)
    k_x, k_g, k_b, k_w, k_c = jax.random.split(key, 5)

    N, Cin, Cout, H, W = 2, 4, 2, 16, 16
    x = jax.random.normal(k_x, (N, Cin, H, W), dtype=jnp.float32)

    # Deterministic synthetic parameters (shapes per nn.BatchNorm2d / nn.Conv2d 1x1)
    gamma = 1.0 + 0.1 * jax.random.normal(k_g, (Cin,), dtype=jnp.float32)
    beta = 0.1 * jax.random.normal(k_b, (Cin,), dtype=jnp.float32)
    conv_w = jax.random.normal(k_w, (Cout, Cin, 1, 1), dtype=jnp.float32) * 0.5
    conv_b = 0.1 * jax.random.normal(k_c, (Cout,), dtype=jnp.float32)

    out = transition_layer(x, gamma, beta, conv_w, conv_b)
    out = jax.block_until_ready(out)

    ref = _reference(x, gamma, beta, conv_w, conv_b)
    assert out.shape == (N, Cout, H // 2, W // 2), out.shape
    assert jnp.allclose(out, ref, atol=1e-5, rtol=1e-5), float(jnp.max(jnp.abs(out - ref)))

    print("KERNEL_OK")
</pallas_src>

<mosaic_0001>
module attributes {stable_mosaic.version = 11 : i64} {
  func.func @_transition_kernel(%arg0: i32, %arg1: i32, %arg2: memref<1x8x2x8x8xf32, #tpu.memory_space<vmem>>, %arg3: memref<1x8xf32, #tpu.memory_space<vmem>>, %arg4: memref<1x8xf32, #tpu.memory_space<vmem>>, %arg5: memref<4x128xf32, #tpu.memory_space<vmem>>, %arg6: memref<1x128xf32, #tpu.memory_space<vmem>>, %arg7: memref<1x8x8x128xf32, #tpu.memory_space<vmem>>) attributes {dimension_semantics = [#tpu.dimension_semantics<parallel>, #tpu.dimension_semantics<parallel>], iteration_bounds = array<i64: 2, 1>, scalar_prefetch = 0 : i64, scratch_operands = 0 : i64, tpu.core_type = #tpu.core_type<tc>, window_params = [{transform_indices = @transform_0, window_bounds = array<i64: 1, 8, 2, 8, 8>}, {pipeline_mode = #tpu.pipeline_mode<synchronous>, transform_indices = @transform_1, window_bounds = array<i64: 1, 8>}, {pipeline_mode = #tpu.pipeline_mode<synchronous>, transform_indices = @transform_2, window_bounds = array<i64: 1, 8>}, {pipeline_mode = #tpu.pipeline_mode<synchronous>, transform_indices = @transform_3, window_bounds = array<i64: 4, 128>}, {pipeline_mode = #tpu.pipeline_mode<synchronous>, transform_indices = @transform_4, window_bounds = array<i64: 1, 128>}, {transform_indices = @transform_5, window_bounds = array<i64: 1, 8, 8, 128>}]} {
    %c0 = arith.constant 0 : index
    %c0_0 = arith.constant 0 : index
    %c0_1 = arith.constant 0 : index
    %c0_2 = arith.constant 0 : index
    %c0_3 = arith.constant 0 : index
    %0 = vector.load %arg2[%c0, %c0_0, %c0_1, %c0_2, %c0_3] : memref<1x8x2x8x8xf32, #tpu.memory_space<vmem>>, vector<1x8x2x8x8xf32>
    %1 = vector.shape_cast %0 : vector<1x8x2x8x8xf32> to vector<8x2x8x8xf32>
    %c0_4 = arith.constant 0 : index
    %c0_5 = arith.constant 0 : index
    %2 = vector.load %arg3[%c0_4, %c0_5] : memref<1x8xf32, #tpu.memory_space<vmem>>, vector<1x8xf32>
    %3 = vector.shape_cast %2 : vector<1x8xf32> to vector<8xf32>
    %4 = vector.shape_cast %3 : vector<8xf32> to vector<1x1x1x8xf32>
    %5 = vector.broadcast %4 : vector<1x1x1x8xf32> to vector<8x2x8x8xf32>
    %6 = arith.mulf %1, %5 : vector<8x2x8x8xf32>
    %c0_6 = arith.constant 0 : index
    %c0_7 = arith.constant 0 : index
    %7 = vector.load %arg4[%c0_6, %c0_7] : memref<1x8xf32, #tpu.memory_space<vmem>>, vector<1x8xf32>
    %8 = vector.shape_cast %7 : vector<1x8xf32> to vector<8xf32>
    %9 = vector.shape_cast %8 : vector<8xf32> to vector<1x1x1x8xf32>
    %10 = vector.broadcast %9 : vector<1x1x1x8xf32> to vector<8x2x8x8xf32>
    %11 = arith.addf %6, %10 : vector<8x2x8x8xf32>
    %cst = arith.constant 0.000000e+00 : f32
    %12 = vector.broadcast %cst : f32 to vector<8x2x8x8xf32>
    %13 = arith.maximumf %11, %12 : vector<8x2x8x8xf32>
    %14 = vector.extract_strided_slice %13 {offsets = [0, 0, 0, 0], sizes = [8, 1, 8, 8], strides = [1, 1, 1, 1]} : vector<8x2x8x8xf32> to vector<8x1x8x8xf32>
    %15 = vector.shape_cast %14 : vector<8x1x8x8xf32> to vector<8x8x8xf32>
    %16 = vector.extract_strided_slice %13 {offsets = [0, 1, 0, 0], sizes = [8, 1, 8, 8], strides = [1, 1, 1, 1]} : vector<8x2x8x8xf32> to vector<8x1x8x8xf32>
    %17 = vector.shape_cast %16 : vector<8x1x8x8xf32> to vector<8x8x8xf32>
    %18 = arith.addf %15, %17 : vector<8x8x8xf32>
    %19 = vector.extract_strided_slice %18 {offsets = [0, 0, 0], sizes = [8, 8, 4], strides = [1, 1, 1]} : vector<8x8x8xf32> to vector<8x8x4xf32>
    %20 = vector.extract_strided_slice %18 {offsets = [0, 0, 4], sizes = [8, 8, 4], strides = [1, 1, 1]} : vector<8x8x8xf32> to vector<8x8x4xf32>
    %21 = arith.addf %19, %20 : vector<8x8x4xf32>
    %22 = vector.shape_cast %21 : vector<8x8x4xf32> to vector<64x4xf32>
    %c0_8 = arith.constant 0 : index
    %c0_9 = arith.constant 0 : index
    %23 = vector.load %arg5[%c0_8, %c0_9] : memref<4x128xf32, #tpu.memory_space<vmem>>, vector<4x128xf32>
    %cst_10 = arith.constant dense<0.000000e+00> : vector<64x128xf32>
    %24 = tpu.matmul %22, %23, %cst_10 {dimension_numbers = #tpu.dot_dimension_numbers<[1], [0], [0], [1], [0, 0, 1, 1], [], []>} : vector<64x4xf32>, vector<4x128xf32>, vector<64x128xf32> -> vector<64x128xf32>
    %c0_11 = arith.constant 0 : index
    %c0_12 = arith.constant 0 : index
    %25 = vector.load %arg6[%c0_11, %c0_12] : memref<1x128xf32, #tpu.memory_space<vmem>>, vector<1x128xf32>
    %26 = vector.shape_cast %25 : vector<1x128xf32> to vector<128xf32>
    %27 = vector.shape_cast %26 : vector<128xf32> to vector<1x128xf32>
    %28 = vector.broadcast %27 : vector<1x128xf32> to vector<64x128xf32>
    %29 = arith.addf %24, %28 : vector<64x128xf32>
    %30 = vector.shape_cast %29 : vector<64x128xf32> to vector<8x8x128xf32>
    %c0_13 = arith.constant 0 : index
    %c0_14 = arith.constant 0 : index
    %c0_15 = arith.constant 0 : index
    %c0_16 = arith.constant 0 : index
    %31 = vector.load %arg7[%c0_13, %c0_14, %c0_15, %c0_16] : memref<1x8x8x128xf32, #tpu.memory_space<vmem>>, vector<1x8x8x128xf32>
    %32 = vector.shape_cast %31 : vector<1x8x8x128xf32> to vector<8x8x128xf32>
    %33 = vector.shape_cast %30 : vector<8x8x128xf32> to vector<1x8x8x128xf32>
    tpu.vector_store %arg7[%c0_13, %c0_14, %c0_15, %c0_16], %33 {strides = array<i32>} : memref<1x8x8x128xf32, #tpu.memory_space<vmem>>, vector<1x8x8x128xf32>,
    return
  }
  func.func @transform_0(%arg0: i32, %arg1: i32) -> (i32, i32, i32, i32, i32) {
    %c0_i32 = arith.constant 0 : i32
    %c0_i32_0 = arith.constant 0 : i32
    %c0_i32_1 = arith.constant 0 : i32
    %c0_i32_2 = arith.constant 0 : i32
    return %arg0, %arg1, %c0_i32, %c0_i32_0, %c0_i32_1 : i32, i32, i32, i32, i32
  }
  func.func @transform_1(%arg0: i32, %arg1: i32) -> (i32, i32) {
    %c0_i32 = arith.constant 0 : i32
    %c0_i32_0 = arith.constant 0 : i32
    %c0_i32_1 = arith.constant 0 : i32
    return %c0_i32, %c0_i32_0 : i32, i32
  }
  func.func @transform_2(%arg0: i32, %arg1: i32) -> (i32, i32) {
    %c0_i32 = arith.constant 0 : i32
    %c0_i32_0 = arith.constant 0 : i32
    %c0_i32_1 = arith.constant 0 : i32
    return %c0_i32, %c0_i32_0 : i32, i32
  }
  func.func @transform_3(%arg0: i32, %arg1: i32) -> (i32, i32) {
    %c0_i32 = arith.constant 0 : i32
    %c0_i32_0 = arith.constant 0 : i32
    %c0_i32_1 = arith.constant 0 : i32
    return %c0_i32, %c0_i32_0 : i32, i32
  }
  func.func @transform_4(%arg0: i32, %arg1: i32) -> (i32, i32) {
    %c0_i32 = arith.constant 0 : i32
    %c0_i32_0 = arith.constant 0 : i32
    %c0_i32_1 = arith.constant 0 : i32
    return %c0_i32, %c0_i32_0 : i32, i32
  }
  func.func @transform_5(%arg0: i32, %arg1: i32) -> (i32, i32, i32, i32) {
    %c0_i32 = arith.constant 0 : i32
    %c0_i32_0 = arith.constant 0 : i32
    %c0_i32_1 = arith.constant 0 : i32
    return %arg0, %arg1, %c0_i32, %c0_i32_0 : i32, i32, i32, i32
  }
}

</mosaic_0001>

<llo_original>
// kernel: tpu_custom_call.1
$region0: #{tpu_custom_call.1}
  #allocation0 [shape = 'u32[]', space=smem, size = 0x4, offset = 0x4, fixed_abs, tag = 'smem constant byte address 0x4 - core index']
  #allocation1 [shape = 'u32[72,128]{1,0:T(1,128)}', space=vmem, size = 0x9000, scoped, tag = 'internal scratch']
  %s0 = inlined_call_operand.hbm [shape: f32[2,8,2,8,8], index: 0, kind: input, shape index: {}]
  %s1 = inlined_call_operand.hbm [shape: f32[1,8], index: 1, kind: input, shape index: {}]
  %s2 = inlined_call_operand.vmem [shape: f32[1,8], index: 2, kind: input, shape index: {}]
  %s3 = inlined_call_operand.hbm [shape: f32[4,128], index: 3, kind: input, shape index: {}]
  %s4 = inlined_call_operand.vmem [shape: f32[1,128], index: 4, kind: input, shape index: {}]
  %s5 = inlined_call_operand.hbm [shape: f32[2,8,8,128], index: 5, kind: output, shape index: {}]
  %s6 = sld [smem:[#allocation0]]
  $region65: #{tpu_custom_call.1} parent=0
    _
  %s8 = ssub.s32 1, %s6
  %s9 = scalar_select 0, %s8, %s6
  $region1: #{tpu_custom_call.1} parent=0
    #allocation2 [shape = 'u8[131072]{0}', space=vmem, size = 0x20000, scoped, tag = 'input window, operand 0']
    #allocation3 [shape = 's32[2]{0}', space=sflag, size = 0x8, scoped, tag = 'scoped memory for tpu_custom_call.1']
    #allocation4 [shape = 's32[2]{0}', space=sflag, size = 0x8, scoped, tag = 'scoped memory for tpu_custom_call.1']
    #allocation5 [shape = 'u8[512]{0}', space=vmem, size = 0x400, scoped, tag = 'input window, operand 1, single buffered']
    #allocation6 [shape = 's32[1]{0}', space=sflag, size = 0x4, scoped, tag = 'scoped memory for tpu_custom_call.1']
    #allocation7 [shape = 'u8[2048]{0}', space=vmem, size = 0x800, scoped, tag = 'input window, operand 3, single buffered']
    #allocation8 [shape = 'u8[65536]{0}', space=vmem, size = 0x10000, scoped, tag = 'output window, operand 0']
    %10 = vsyncpa [#allocation3], 0
    %s11 = scalar_lea.sflag [#allocation3], 1
    %12 = vsyncpa %s11, 0
    %13 = vsyncpa [#allocation6], 0
    %14 = vsyncpa [#allocation4], 0
    %s15 = scalar_lea.sflag [#allocation4], 1
    %16 = vsyncpa %s15, 0
    loop: start=0, step=1, limit=4
    $region2: #{tpu_custom_call.1} parent=1 // loop_pre_header
      _
    $region3: #{tpu_custom_call.1} parent=1 // loop_header
      %s18 = sphi 0, %s22
      %p19 = scmp.ge.s32.totalorder %s18, 4
      %s25 = sphi 0, %s37
      %s26 = sphi 0, %s33
      %s27 = sphi 0, %s25
      %s28 = sphi 0, %s26
      %s29 = sphi 0, %s27
      %s30 = sphi 0, %s28
      %s42 = sphi 0, %s44
      %s45 = sphi 0, %s42
      %s46 = sphi 0, %s45
      %s62 = sphi 0, %s46
      %s66 = sphi 0, %s66
      %s68 = sphi 0, %s66
      %s69 = sphi 0, %s68
      %s83 = sphi 0, %s69
      %s87 = sphi 0, %s87
      %s89 = sphi 0, %s87
      %s90 = sphi 0, %s89
      %s104 = sphi 0, %s90
      %s108 = sphi 0, %s108
      %s110 = sphi 0, %s108
      %s111 = sphi 0, %s110
      %s125 = sphi 0, %s111
      %s129 = sphi 0, %s129
      %s131 = sphi 0, %s129
      %s132 = sphi 0, %s131
      %s146 = sphi 0, %s132
      %s154 = sphi 0, %s156
      %s157 = sphi 0, %s154
      %s158 = sphi 0, %s157
      %s174 = sphi 0, %s158
    $region4: #{tpu_custom_call.1} parent=1 // loop_header_branch
      %21 = sbr.rel (%p19) target = $region8
    $region5: #{tpu_custom_call.1} parent=1 // loop_body
      %s23 = ssub.s32 %s18, 1
      %s24 = ssub.s32 %s18, 2
      %s31 = sadd.s32 1, %s26
      %p32 = scmp.ge.s32.totalorder %s31, 1
      %s33 = scalar_select %p32, 0, %s31
      %s34 = sadd.s32 1, %s25
      %s35 = scalar_select %p32, %s34, %s25
      %p36 = scmp.ge.s32.totalorder %s35, 2
      %s37 = scalar_select %p36, 0, %s35
      %s38 = ssub.s32 %s25, %s37
      %s39 = ssub.s32 %s26, %s33
      %s40 = sor.u32 %s38, %s39
      %p41 = scmp.eq.s32.totalorder %s40, 0
      %s43 = sadd.s32 %s42, 1
      %s44 = scalar_select %p41, %s42, %s43
      %p47 = pneg %p41
      %p48 = scmp.eq.s32.totalorder %s18, 1
      %p49 = por %p47, %p48
      %p50 = scmp.ne.s32.totalorder %s42, %s45
      %p51 = scmp.eq.s32.totalorder %s18, 0
      %p52 = por %p50, %p51
      %p53 = scmp.ne.s32.totalorder %s42, %s45
      %p54 = scmp.eq.s32.totalorder %s23, 1
      %p55 = por %p53, %p54
      %p56 = scmp.ne.s32.totalorder %s45, %s46
      %p57 = scmp.eq.s32.totalorder %s23, 0
      %p58 = por %p56, %p57
      %p59 = scmp.ne.s32.totalorder %s45, %s46
      %p60 = scmp.eq.s32.totalorder %s24, 1
      %p61 = por %p59, %p60
      %p63 = scmp.ne.s32.totalorder %s46, %s62
      %p64 = scmp.eq.s32.totalorder %s24, 0
      %p65 = por %p63, %p64
      %s67 = sadd.s32 %s66, 1
      %p70 = scmp.eq.s32.totalorder %s18, 1
      %p71 = scmp.ne.s32.totalorder %s66, %s68
      %p72 = scmp.eq.s32.totalorder %s18, 0
      %p73 = por %p71, %p72
      %p74 = scmp.ne.s32.totalorder %s66, %s68
      %p75 = scmp.eq.s32.totalorder %s23, 1
      %p76 = por %p74, %p75
      %p77 = scmp.ne.s32.totalorder %s68, %s69
      %p78 = scmp.eq.s32.totalorder %s23, 0
      %p79 = por %p77, %p78
      %p80 = scmp.ne.s32.totalorder %s68, %s69
      %p81 = scmp.eq.s32.totalorder %s24, 1
      %p82 = por %p80, %p81
      %p84 = scmp.ne.s32.totalorder %s69, %s83
      %p85 = scmp.eq.s32.totalorder %s24, 0
      %p86 = por %p84, %p85
      %s88 = sadd.s32 %s87, 1
      %p91 = scmp.eq.s32.totalorder %s18, 1
      %p92 = scmp.ne.s32.totalorder %s87, %s89
      %p93 = scmp.eq.s32.totalorder %s18, 0
      %p94 = por %p92, %p93
      %p95 = scmp.ne.s32.totalorder %s87, %s89
      %p96 = scmp.eq.s32.totalorder %s23, 1
      %p97 = por %p95, %p96
      %p98 = scmp.ne.s32.totalorder %s89, %s90
      %p99 = scmp.eq.s32.totalorder %s23, 0
      %p100 = por %p98, %p99
      %p101 = scmp.ne.s32.totalorder %s89, %s90
      %p102 = scmp.eq.s32.totalorder %s24, 1
      %p103 = por %p101, %p102
      %p105 = scmp.ne.s32.totalorder %s90, %s104
      %p106 = scmp.eq.s32.totalorder %s24, 0
      %p107 = por %p105, %p106
      %s109 = sadd.s32 %s108, 1
      %p112 = scmp.eq.s32.totalorder %s18, 1
      %p113 = scmp.ne.s32.totalorder %s108, %s110
      %p114 = scmp.eq.s32.totalorder %s18, 0
      %p115 = por %p113, %p114
      %p116 = scmp.ne.s32.totalorder %s108, %s110
      %p117 = scmp.eq.s32.totalorder %s23, 1
      %p118 = por %p116, %p117
      %p119 = scmp.ne.s32.totalorder %s110, %s111
      %p120 = scmp.eq.s32.totalorder %s23, 0
      %p121 = por %p119, %p120
      %p122 = scmp.ne.s32.totalorder %s110, %s111
      %p123 = scmp.eq.s32.totalorder %s24, 1
      %p124 = por %p122, %p123
      %p126 = scmp.ne.s32.totalorder %s111, %s125
      %p127 = scmp.eq.s32.totalorder %s24, 0
      %p128 = por %p126, %p127
      %s130 = sadd.s32 %s129, 1
      %p133 = scmp.eq.s32.totalorder %s18, 1
      %p134 = scmp.ne.s32.totalorder %s129, %s131
      %p135 = scmp.eq.s32.totalorder %s18, 0
      %p136 = por %p134, %p135
      %p137 = scmp.ne.s32.totalorder %s129, %s131
      %p138 = scmp.eq.s32.totalorder %s23, 1
      %p139 = por %p137, %p138
      %p140 = scmp.ne.s32.totalorder %s131, %s132
      %p141 = scmp.eq.s32.totalorder %s23, 0
      %p142 = por %p140, %p141
      %p143 = scmp.ne.s32.totalorder %s131, %s132
      %p144 = scmp.eq.s32.totalorder %s24, 1
      %p145 = por %p143, %p144
      %p147 = scmp.ne.s32.totalorder %s132, %s146
      %p148 = scmp.eq.s32.totalorder %s24, 0
      %p149 = por %p147, %p148
      %s150 = ssub.s32 %s25, %s37
      %s151 = ssub.s32 %s26, %s33
      %s152 = sor.u32 %s150, %s151
      %p153 = scmp.eq.s32.totalorder %s152, 0
      %s155 = sadd.s32 %s154, 1
      %s156 = scalar_select %p153, %s154, %s155
      %p159 = pneg %p153
      %p160 = scmp.eq.s32.totalorder %s18, 1
      %p161 = por %p159, %p160
      %p162 = scmp.ne.s32.totalorder %s154, %s157
      %p163 = scmp.eq.s32.totalorder %s18, 0
      %p164 = por %p162, %p163
      %p165 = scmp.ne.s32.totalorder %s154, %s157
      %p166 = scmp.eq.s32.totalorder %s23, 1
      %p167 = por %p165, %p166
      %p168 = scmp.ne.s32.totalorder %s157, %s158
      %p169 = scmp.eq.s32.totalorder %s23, 0
      %p170 = por %p168, %p169
      %p171 = scmp.ne.s32.totalorder %s157, %s158
      %p172 = scmp.eq.s32.totalorder %s24, 1
      %p173 = por %p171, %p172
      %p175 = scmp.ne.s32.totalorder %s158, %s174
      %p176 = scmp.eq.s32.totalorder %s24, 0
      %p177 = por %p175, %p176
      %p178 = scmp.le.s32.totalorder 1, %s18
      %p179 = scmp.lt.s32.totalorder %s18, 3
      %p180 = pnand %p178, %p179
      %p181 = pneg %p180
      // Predicated region
      $region9: #{tpu_custom_call.1} parent=5 // pred_check
        _
      $region10: #{tpu_custom_call.1} parent=5 // pred_check_branch
        %183 = sbr.rel (%p180) target = $region12
      $region11: #{tpu_custom_call.1} parent=5 // pred_region
        %s184 = ssub.s32 %s18, 1
        // Predicated region
        $region13: #{tpu_custom_call.1} parent=11 // pred_check
          %p185 = pneg %p79
        $region14: #{tpu_custom_call.1} parent=11 // pred_check_branch
          %187 = sbr.rel (%p185) target = $region16
        $region15: #{tpu_custom_call.1} parent=11 // pred_region
          %189 = vsyncadd [#allocation6], 0
          %s191 = sshll.u32 %s1, 4
          %s192 = int_to_ptr.hbm [resolvable:$true] %s191
          %s193 = sshll.u32 [#allocation5], 4
          %s194 = int_to_ptr.vmem [resolvable:$true] %s193
          %196 = dma.hbm_to_vmem [thread:$0]  %s192, 16, %s194, [#allocation6]
        $region16: #{tpu_custom_call.1} parent=11 // pred_fallthru
          _
        // Predicated region
        $region17: #{tpu_custom_call.1} parent=11 // pred_check
          %p197 = pneg %p100
        $region18: #{tpu_custom_call.1} parent=11 // pred_check_branch
          %199 = sbr.rel (%p197) target = $region20
        $region19: #{tpu_custom_call.1} parent=11 // pred_region
          _
        $region20: #{tpu_custom_call.1} parent=11 // pred_fallthru
          _
        // Predicated region
        $region21: #{tpu_custom_call.1} parent=11 // pred_check
          %p200 = pneg %p121
        $region22: #{tpu_custom_call.1} parent=11 // pred_check_branch
          %202 = sbr.rel (%p200) target = $region24
        $region23: #{tpu_custom_call.1} parent=11 // pred_region
          %204 = vsyncadd [#allocation6], 0
          %s206 = sshll.u32 %s3, 4
          %s207 = int_to_ptr.hbm [resolvable:$true] %s206
          %s208 = sshll.u32 [#allocation7], 4
          %s209 = int_to_ptr.vmem [resolvable:$true] %s208
          %211 = dma.hbm_to_vmem [thread:$0]  %s207, 64, %s209, [#allocation6]
        $region24: #{tpu_custom_call.1} parent=11 // pred_fallthru
          _
        // Predicated region
        $region25: #{tpu_custom_call.1} parent=11 // pred_check
          %p212 = pneg %p142
        $region26: #{tpu_custom_call.1} parent=11 // pred_check_branch
          %214 = sbr.rel (%p212) target = $region28
        $region27: #{tpu_custom_call.1} parent=11 // pred_region
          _
        $region28: #{tpu_custom_call.1} parent=11 // pred_fallthru
          _
      $region12: #{tpu_custom_call.1} parent=5 // pred_fallthru
        _
      %p215 = scmp.lt.s32.totalorder %s18, 2
      // Predicated region
      $region29: #{tpu_custom_call.1} parent=5 // pred_check
        %p216 = pneg %p215
      $region30: #{tpu_custom_call.1} parent=5 // pred_check_branch
        %218 = sbr.rel (%p216) target = $region32
      $region31: #{tpu_custom_call.1} parent=5 // pred_region
        // Predicated region
        $region33: #{tpu_custom_call.1} parent=31 // pred_check
          %p219 = pneg %p52
        $region34: #{tpu_custom_call.1} parent=31 // pred_check_branch
          %221 = sbr.rel (%p219) target = $region36
        $region35: #{tpu_custom_call.1} parent=31 // pred_region
          %s222 = sand.u32 %s42, 1
          %s223 = scalar_lea.sflag [#allocation3], %s222
          %s224 = sand.u32 %s42, 1
          %s225 = smul.addr %s224, 128
          %s226 = scalar_lea.vmem [#allocation2], %s225
          %s227 = smul.u32 8, %s26
          %229 = vsyncadd %s223, 0
          %s230 = smul.addr %s227, 2
          %s231 = smul.addr %s25, 16
          %s232 = sadd.s32 %s230, %s231
          %s233 = smul.addr %s232, 8
          %s234 = scalar_lea.hbm %s0, %s233
          %s235 = sshll.u32 %s234, 4
          %s236 = int_to_ptr.hbm [resolvable:$true] %s235
          %s237 = sshll.u32 %s226, 4
          %s238 = int_to_ptr.vmem [resolvable:$true] %s237
          %243 = dma.hbm_to_vmem [thread:$0]  %s236, 2048, %s238, %s223, 128, 128, 8
        $region36: #{tpu_custom_call.1} parent=31 // pred_fallthru
          _
      $region32: #{tpu_custom_call.1} parent=5 // pred_fallthru
        _
      %p244 = scmp.le.s32.totalorder 1, %s18
      %p245 = scmp.lt.s32.totalorder %s18, 3
      %p246 = pnand %p244, %p245
      %p247 = pneg %p246
      // Predicated region
      $region37: #{tpu_custom_call.1} parent=5 // pred_check
        _
      $region38: #{tpu_custom_call.1} parent=5 // pred_check_branch
        %249 = sbr.rel (%p246) target = $region40
      $region39: #{tpu_custom_call.1} parent=5 // pred_region
        %s250 = ssub.s32 %s18, 1
        %s251 = sand.u32 %s45, 1
        %s252 = scalar_lea.sflag [#allocation3], %s251
        %s253 = sand.u32 %s45, 1
        %s254 = smul.addr %s253, 128
        %s255 = scalar_lea.vmem [#allocation2], %s254
        // Predicated region
        $region41: #{tpu_custom_call.1} parent=39 // pred_check
          %p256 = pneg %p58
        $region42: #{tpu_custom_call.1} parent=39 // pred_check_branch
          %258 = sbr.rel (%p256) target = $region44
        $region43: #{tpu_custom_call.1} parent=39 // pred_region
          %260 = dma.done %s252, 2048
        $region44: #{tpu_custom_call.1} parent=39 // pred_fallthru
          _
        // Predicated region
        $region45: #{tpu_custom_call.1} parent=39 // pred_check
          %p261 = pneg %p79
        $region46: #{tpu_custom_call.1} parent=39 // pred_check_branch
          %263 = sbr.rel (%p261) target = $region48
        $region47: #{tpu_custom_call.1} parent=39 // pred_region
          %265 = dma.done [#allocation6], 16
        $region48: #{tpu_custom_call.1} parent=39 // pred_fallthru
          _
        // Predicated region
        $region49: #{tpu_custom_call.1} parent=39 // pred_check
          %p266 = pneg %p121
        $region50: #{tpu_custom_call.1} parent=39 // pred_check_branch
          %268 = sbr.rel (%p266) target = $region52
        $region51: #{tpu_custom_call.1} parent=39 // pred_region
          %270 = dma.done [#allocation6], 64
        $region52: #{tpu_custom_call.1} parent=39 // pred_fallthru
          _
        %s271 = sand.u32 %s45, 1
        %s272 = scalar_lea.sflag [#allocation3], %s271
        %s273 = sand.u32 %s45, 1
        %s274 = smul.addr %s273, 128
        %s275 = scalar_lea.vmem [#allocation2], %s274
        %p276 = pneg %p58
        %p277 = pneg %p55
        %p278 = pneg %p79
        %p279 = pneg %p76
        %p280 = pneg %p100
        %p281 = pneg %p97
        %p282 = pneg %p121
        %p283 = pneg %p118
        %p284 = pneg %p142
        %p285 = pneg %p139
        %p286 = pneg %p170
        %p287 = pneg %p167
        %s288 = sand.u32 %s157, 1
        %s289 = scalar_lea.sflag [#allocation4], %s288
        %s290 = sand.u32 %s157, 1
        %s291 = smul.addr %s290, 64
        %s292 = scalar_lea.vmem [#allocation8], %s291
        %s293 = smul.u32 8, %s28
        %s294 = smul.u32 8, %s28
        %v295 = vld [vmem:[%s255] sm:$0xff]
        %v296 = vld [vmem:[%s255 + $0x8] sm:$0xff]
        %v297 = vld [vmem:[%s255 + $0x10] sm:$0xff]
        %v298 = vld [vmem:[%s255 + $0x18] sm:$0xff]
        %v299 = vld [vmem:[%s255 + $0x20] sm:$0xff]
        %v300 = vld [vmem:[%s255 + $0x28] sm:$0xff]
        %v301 = vld [vmem:[%s255 + $0x30] sm:$0xff]
        %v302 = vld [vmem:[%s255 + $0x38] sm:$0xff]
        %v303 = vld [vmem:[%s255 + $0x40] sm:$0xff]
        %v304 = vld [vmem:[%s255 + $0x48] sm:$0xff]
        %v305 = vld [vmem:[%s255 + $0x50] sm:$0xff]
        %v306 = vld [vmem:[%s255 + $0x58] sm:$0xff]
        %v307 = vld [vmem:[%s255 + $0x60] sm:$0xff]
        %v308 = vld [vmem:[%s255 + $0x68] sm:$0xff]
        %v309 = vld [vmem:[%s255 + $0x70] sm:$0xff]
        %v310 = vld [vmem:[%s255 + $0x78] sm:$0xff]
        %v311 = vld [vmem:[#allocation5] sm:$0x1]
        %v313 = vperm.slane %v311, 0
        %v315 = vmul.f32 %v295, %v313
        %v316 = vmul.f32 %v296, %v313
        %v317 = vmul.f32 %v297, %v313
        %v318 = vmul.f32 %v298, %v313
        %v319 = vmul.f32 %v299, %v313
        %v320 = vmul.f32 %v300, %v313
        %v321 = vmul.f32 %v301, %v313
        %v322 = vmul.f32 %v302, %v313
        %v323 = vmul.f32 %v303, %v313
        %v324 = vmul.f32 %v304, %v313
        %v325 = vmul.f32 %v305, %v313
        %v326 = vmul.f32 %v306, %v313
        %v327 = vmul.f32 %v307, %v313
        %v328 = vmul.f32 %v308, %v313
        %v329 = vmul.f32 %v309, %v313
        %v330 = vmul.f32 %v310, %v313
        %v331 = vld [vmem:[%s2] sm:$0x1]
        %v333 = vperm.slane %v331, 0
        %v335 = vadd.f32 %v315, %v333
        %v336 = vadd.f32 %v316, %v333
        %v337 = vadd.f32 %v317, %v333
        %v338 = vadd.f32 %v318, %v333
        %v339 = vadd.f32 %v319, %v333
        %v340 = vadd.f32 %v320, %v333
        %v341 = vadd.f32 %v321, %v333
        %v342 = vadd.f32 %v322, %v333
        %v343 = vadd.f32 %v323, %v333
        %v344 = vadd.f32 %v324, %v333
        %v345 = vadd.f32 %v325, %v333
        %v346 = vadd.f32 %v326, %v333
        %v347 = vadd.f32 %v327, %v333
        %v348 = vadd.f32 %v328, %v333
        %v349 = vadd.f32 %v329, %v333
        %v350 = vadd.f32 %v330, %v333
        %v351 = vmax.f32 %v335, 0.0
        %v352 = vmax.f32 %v336, 0.0
        %v353 = vmax.f32 %v337, 0.0
        %v354 = vmax.f32 %v338, 0.0
        %v355 = vmax.f32 %v339, 0.0
        %v356 = vmax.f32 %v340, 0.0
        %v357 = vmax.f32 %v341, 0.0
        %v358 = vmax.f32 %v342, 0.0
        %v359 = vmax.f32 %v343, 0.0
        %v360 = vmax.f32 %v344, 0.0
        %v361 = vmax.f32 %v345, 0.0
        %v362 = vmax.f32 %v346, 0.0
        %v363 = vmax.f32 %v347, 0.0
        %v364 = vmax.f32 %v348, 0.0
        %v365 = vmax.f32 %v349, 0.0
        %v366 = vmax.f32 %v350, 0.0
        %v367 = vadd.f32 %v351, %v352
        %v368 = vadd.f32 %v353, %v354
        %v369 = vadd.f32 %v355, %v356
        %v370 = vadd.f32 %v357, %v358
        %v371 = vadd.f32 %v359, %v360
        %v372 = vadd.f32 %v361, %v362
        %v373 = vadd.f32 %v363, %v364
        %v374 = vadd.f32 %v365, %v366
        %383 = vrot.lane.b32.xlu0 %v367, 124
        %v384 = vpop.permute.xlu0 %383
        %385 = vrot.lane.b32.xlu0 %v368, 124
        %v386 = vpop.permute.xlu0 %385
        %387 = vrot.lane.b32.xlu0 %v369, 124
        %v388 = vpop.permute.xlu0 %387
        %389 = vrot.lane.b32.xlu0 %v370, 124
        %v390 = vpop.permute.xlu0 %389
        %391 = vrot.lane.b32.xlu0 %v371, 124
        %v392 = vpop.permute.xlu0 %391
        %393 = vrot.lane.b32.xlu0 %v372, 124
        %v394 = vpop.permute.xlu0 %393
        %395 = vrot.lane.b32.xlu0 %v373, 124
        %v396 = vpop.permute.xlu0 %395
        %397 = vrot.lane.b32.xlu0 %v374, 124
        %v398 = vpop.permute.xlu0 %397
        %v407 = vadd.f32 %v367, %v384
        %v408 = vadd.f32 %v368, %v386
        %v409 = vadd.f32 %v369, %v388
        %v410 = vadd.f32 %v370, %v390
        %v411 = vadd.f32 %v371, %v392
        %v412 = vadd.f32 %v372, %v394
        %v413 = vadd.f32 %v373, %v396
        %v414 = vadd.f32 %v374, %v398
        %v415 = vld [vmem:[#allocation7] sm:$0xf]
        %v416 = vld [vmem:[%s4] sm:$0x1]
        %v418 = vperm.slane %v416, 0
        %vm420 = vcmask 31744
        %v422 = vsel %vm420, %v407, 0
        %v425 = vsel %vm420, %v408, 0
        %v428 = vsel %vm420, %v409, 0
        %v431 = vsel %vm420, %v410, 0
        %v434 = vsel %vm420, %v411, 0
        %v437 = vsel %vm420, %v412, 0
        %v440 = vsel %vm420, %v413, 0
        %v443 = vsel %vm420, %v414, 0
        %vm445 = vcmask 1043456
        %v447 = vsel %vm445, %v415, 0
        %449 = vmatpush.msra.mxu0 0.0
        %450 = vmatpush.msra.mxu0 0.0
        %451 = vmatpush.msra.mxu0 0.0
        %452 = vmatpush.msra.mxu0 0.0
        %453 = vmatpush.msra.mxu0 0.0
        %454 = vmatpush.msra.mxu0 0.0
        %455 = vmatpush.msra.mxu0 0.0
        %456 = vmatpush.msra.mxu0 0.0
        %457 = vmatpush.msra.mxu0 0.0
        %458 = vmatpush.msra.mxu0 0.0
        %459 = vmatpush.msra.mxu0 0.0
        %460 = vmatpush.msra.mxu0 0.0
        %461 = vmatpush.msra.mxu0 0.0
        %462 = vmatpush.msra.mxu0 0.0
        %463 = vmatpush.msra.mxu0 0.0
        %464 = vmatpush.msra.mxu0 %v447
        %465 = vmatmul.f32.gmra.mxu0 %v422
        %v466 = vpop.f32.mrf.mxu0
        %v467 = vadd.f32 %v418, %v466
        %468 = vmatmul.f32.gmra.mxu0 %v425
        %v469 = vpop.f32.mrf.mxu0
        %v470 = vadd.f32 %v418, %v469
        %471 = vmatmul.f32.gmra.mxu0 %v428
        %v472 = vpop.f32.mrf.mxu0
        %v473 = vadd.f32 %v418, %v472
        %474 = vmatmul.f32.gmra.mxu0 %v431
        %v475 = vpop.f32.mrf.mxu0
        %v476 = vadd.f32 %v418, %v475
        %477 = vmatmul.f32.gmra.mxu0 %v434
        %v478 = vpop.f32.mrf.mxu0
        %v479 = vadd.f32 %v418, %v478
        %480 = vmatmul.f32.gmra.mxu0 %v437
        %v481 = vpop.f32.mrf.mxu0
        %v482 = vadd.f32 %v418, %v481
        %483 = vmatmul.f32.gmra.mxu0 %v440
        %v484 = vpop.f32.mrf.mxu0
        %v485 = vadd.f32 %v418, %v484
        %486 = vmatmul.f32.gmra.mxu0 %v443
        %v487 = vpop.f32.mrf.mxu0
        %v488 = vadd.f32 %v418, %v487
        %489 = vdwg.mxu0
        %490 = vst [vmem:[%s292] sm:$0xff] %v467
        %491 = vst [vmem:[%s292 + $0x8] sm:$0xff] %v470
        %492 = vst [vmem:[%s292 + $0x10] sm:$0xff] %v473
        %493 = vst [vmem:[%s292 + $0x18] sm:$0xff] %v476
        %494 = vst [vmem:[%s292 + $0x20] sm:$0xff] %v479
        %495 = vst [vmem:[%s292 + $0x28] sm:$0xff] %v482
        %496 = vst [vmem:[%s292 + $0x30] sm:$0xff] %v485
        %497 = vst [vmem:[%s292 + $0x38] sm:$0xff] %v488
        %s498 = sand.u32 %s157, 1
        %s499 = scalar_lea.sflag [#allocation4], %s498
        %s500 = sand.u32 %s157, 1
        %s501 = smul.addr %s500, 64
        %s502 = scalar_lea.vmem [#allocation8], %s501
        // Predicated region
        $region53: #{tpu_custom_call.1} parent=39 // pred_check
          %p503 = pneg %p167
        $region54: #{tpu_custom_call.1} parent=39 // pred_check_branch
          %505 = sbr.rel (%p503) target = $region56
        $region55: #{tpu_custom_call.1} parent=39 // pred_region
          %s506 = smul.u32 8, %s28
          %508 = vsyncadd %s499, 0
          %s509 = smul.addr %s27, 8
          %s510 = sadd.s32 %s506, %s509
          %s511 = smul.addr %s510, 8
          %s512 = scalar_lea.hbm %s5, %s511
          %s513 = sshll.u32 %s502, 4
          %s514 = int_to_ptr.vmem [resolvable:$true] %s513
          %s515 = sshll.u32 %s512, 4
          %s516 = int_to_ptr.hbm [resolvable:$true] %s515
          %521 = dma.vmem_to_hbm [thread:$0]  %s514, 1024, %s516, %s499, 128, 128, 8
        $region56: #{tpu_custom_call.1} parent=39 // pred_fallthru
          _
      $region40: #{tpu_custom_call.1} parent=5 // pred_fallthru
        _
      %p522 = scmp.le.s32.totalorder 2, %s18
      // Predicated region
      $region57: #{tpu_custom_call.1} parent=5 // pred_check
        %p523 = pneg %p522
      $region58: #{tpu_custom_call.1} parent=5 // pred_check_branch
        %525 = sbr.rel (%p523) target = $region60
      $region59: #{tpu_custom_call.1} parent=5 // pred_region
        %s526 = ssub.s32 %s18, 2
        // Predicated region
        $region61: #{tpu_custom_call.1} parent=59 // pred_check
          %p527 = pneg %p173
        $region62: #{tpu_custom_call.1} parent=59 // pred_check_branch
          %529 = sbr.rel (%p527) target = $region64
        $region63: #{tpu_custom_call.1} parent=59 // pred_region
          %s530 = sand.u32 %s158, 1
          %s531 = scalar_lea.sflag [#allocation4], %s530
          %s532 = sand.u32 %s158, 1
          %s533 = smul.addr %s532, 64
          %s534 = scalar_lea.vmem [#allocation8], %s533
          %536 = dma.done %s531, 1024
        $region64: #{tpu_custom_call.1} parent=59 // pred_fallthru
          _
      $region60: #{tpu_custom_call.1} parent=5 // pred_fallthru
        _
    $region6: #{tpu_custom_call.1} parent=1 // loop_footer
      %s22 = sadd.s32 1, %s18
    $region7: #{tpu_custom_call.1} parent=1 // loop_footer_branch
      %17 = sbr.rel target = $region3
    $region8: #{tpu_custom_call.1} parent=1 // loop_exit
      _
    %537 = vsyncpa [#allocation3], 1
    %s538 = scalar_lea.sflag [#allocation3], 1
    %539 = vsyncpa %s538, 1
    %540 = vsyncpa [#allocation6], 1
    %541 = vsyncpa [#allocation4], 1
    %s542 = scalar_lea.sflag [#allocation4], 1
    %543 = vsyncpa %s542, 1

</llo_original>
